<compile_context>
chip_gen: v5e
topology: v5e:2x2
jax: 0.10.0
libtpu: 0.0.40
codegen_flags: <defaults>
</compile_context>

<pallas_src>
import jax
import jax.numpy as jnp
from jax import lax
from jax.experimental import pallas as pl
from jax.experimental.pallas import tpu as pltpu


def _round_up(x, m):
    return (x + m - 1) // m * m


def _make_style_loss_kernel(b, c, H, W):
    """Build the kernel with static normalization constants baked in."""
    gram_norm = 1.0 / (4.0 * b * c * H * W)   # S.div(4*b*c*H*W)
    mse_denom = float(b * c * c)              # mean over (b, c, c) elements
    # gram normalization is linear, so it can be applied to the *difference*
    # and folded together with the MSE mean into one finalize-time scale.
    final_scale = (gram_norm * gram_norm) / mse_denom
    dn = (((1,), (1,)), ((), ()))             # contract last axis of both operands

    def kernel(s_ref, g_ref, out_ref, acc_ref):
        k = pl.program_id(1)

        @pl.when(k == 0)
        def _init():
            acc_ref[...] = jnp.zeros_like(acc_ref)

        xs = s_ref[0]   # (c, TM)
        xg = g_ref[0]   # (c, TM)

        # Un-normalized gram difference, accumulated across M-tiles.
        # dot_general contracting the last axis of both operands feeds the MXU
        # directly (no explicit .T / XLU transpose of the streamed slab).
        gram_s = lax.dot_general(xs, xs, dimension_numbers=dn,
                                 preferred_element_type=jnp.float32)
        gram_g = lax.dot_general(xg, xg, dimension_numbers=dn,
                                 preferred_element_type=jnp.float32)
        acc_ref[...] += gram_s - gram_g

        @pl.when(k == pl.num_programs(1) - 1)
        def _finalize():
            diff = acc_ref[...]
            partial = jnp.sum(diff * diff) * final_scale
            # lane-dense (1,1,128) write, exactly once per batch
            out_ref[...] = jnp.full(out_ref.shape, partial, dtype=out_ref.dtype)

    return kernel


def style_loss(S, G, *, vmem_tile_budget_bytes=24 << 20):
    """Equivalent of StyleLoss().forward(S, G). S, G: (b, c, H, W) float32."""
    assert S.shape == G.shape
    b, c, H, W = S.shape
    M = H * W
    itemsize = 4  # f32 streaming

    # ---- choose the M-tile size -------------------------------------------
    # 2 inputs x 2 pipeline buffers of a (c, TM) f32 tile must fit the budget
    # (well under v7x's 64 MiB physical VMEM; v5e's 16 MiB scoped default is
    # raised explicitly below).  Keep TM lane-dense (multiple of 128, >=128).
    max_tm = vmem_tile_budget_bytes // (2 * 2 * c * itemsize)
    max_tm = max(128, (max_tm // 128) * 128)
    tm = min(_round_up(M, 128), max_tm, 8192)
    tm = max(tm, 128)

    M_pad = _round_up(M, tm)
    n_k = M_pad // tm

    S_flat = S.reshape(b, c, M)
    G_flat = G.reshape(b, c, M)
    if M_pad != M:
        pad = ((0, 0), (0, 0), (0, M_pad - M))
        # zero padding contributes nothing to x @ x^T, so grams are unchanged
        S_flat = jnp.pad(S_flat, pad)
        G_flat = jnp.pad(G_flat, pad)

    kernel = _make_style_loss_kernel(b, c, H, W)

    # explicit scoped-VMEM limit: input double-buffers + (c,c) scratch + margin
    needed = 2 * 2 * c * tm * itemsize + c * c * 4 + 2 * 128 * 4
    vmem_limit = int(min(max(needed + (8 << 20), 16 << 20), 48 << 20))

    out = pl.pallas_call(
        kernel,
        out_shape=jax.ShapeDtypeStruct((b, 1, 128), jnp.float32),
        grid_spec=pltpu.PrefetchScalarGridSpec(
            num_scalar_prefetch=0,
            grid=(b, n_k),                       # reduction (M-tile) axis last
            in_specs=[
                pl.BlockSpec((1, c, tm), lambda i, k: (i, 0, k)),
                pl.BlockSpec((1, c, tm), lambda i, k: (i, 0, k)),
            ],
            out_specs=pl.BlockSpec((1, 1, 128), lambda i, k: (i, 0, 0)),
            scratch_shapes=[pltpu.VMEM((c, c), jnp.float32)],
        ),
        compiler_params=pltpu.CompilerParams(
            dimension_semantics=("parallel", "arbitrary"),
            vmem_limit_bytes=vmem_limit,
        ),
    )(S_flat, G_flat)

    # per-batch partial losses (broadcast across 128 lanes) -> final scalar
    return jnp.sum(out[:, 0, 0])


def _style_loss_ref(S, G):
    """Pure-JAX reference for verification."""
    b, c, H, W = S.shape
    Sf = S.reshape(b, c, H * W)
    Gf = G.reshape(b, c, H * W)
    gram_s = jnp.einsum("bcm,bdm->bcd", Sf, Sf) / (4 * b * c * H * W)
    gram_g = jnp.einsum("bcm,bdm->bcd", Gf, Gf) / (4 * b * c * H * W)
    return jnp.mean((gram_s - gram_g) ** 2)


if __name__ == "__main__":
    key = jax.random.PRNGKey(0)
    k1, k2 = jax.random.split(key)
    # Small shapes consistent with the module's (b, c, H, W) convention.
    S = jax.random.normal(k1, (2, 4, 16, 16), dtype=jnp.float32)
    G = jax.random.normal(k2, (2, 4, 16, 16), dtype=jnp.float32)

    loss = style_loss(S, G)
    jax.block_until_ready(loss)

    ref = _style_loss_ref(S, G)
    assert jnp.allclose(loss, ref, rtol=1e-5, atol=1e-7), (loss, ref)

    print("KERNEL_OK")
</pallas_src>

<mosaic_0001>
module attributes {stable_mosaic.version = 11 : i64} {
  func.func @kernel(%arg0: i32, %arg1: i32, %arg2: memref<1x4x256xf32, #tpu.memory_space<vmem>>, %arg3: memref<1x4x256xf32, #tpu.memory_space<vmem>>, %arg4: memref<1x1x128xf32, #tpu.memory_space<vmem>>, %arg5: memref<4x4xf32, #tpu.memory_space<vmem>>) attributes {dimension_semantics = [#tpu.dimension_semantics<parallel>, #tpu.dimension_semantics<arbitrary>], iteration_bounds = array<i64: 2, 1>, scalar_prefetch = 0 : i64, scratch_operands = 1 : i64, tpu.core_type = #tpu.core_type<tc>, window_params = [{transform_indices = @transform_0, window_bounds = array<i64: 1, 4, 256>}, {transform_indices = @transform_1, window_bounds = array<i64: 1, 4, 256>}, {transform_indices = @transform_2, window_bounds = array<i64: 1, 1, 128>}]} {
    %c0_i32 = arith.constant 0 : i32
    %0 = arith.cmpi eq, %arg1, %c0_i32 : i32
    %1 = arith.extui %0 : i1 to i32
    %c0_i32_0 = arith.constant 0 : i32
    %2 = arith.cmpi ne, %1, %c0_i32_0 : i32
    scf.if %2 {
      %cst_13 = arith.constant 0.000000e+00 : f32
      %16 = vector.broadcast %cst_13 : f32 to vector<4x4xf32>
      %c0_14 = arith.constant 0 : index
      %c0_15 = arith.constant 0 : index
      %17 = vector.load %arg5[%c0_14, %c0_15] : memref<4x4xf32, #tpu.memory_space<vmem>>, vector<4x4xf32>
      tpu.vector_store %arg5[%c0_14, %c0_15], %16 {strides = array<i32>} : memref<4x4xf32, #tpu.memory_space<vmem>>, vector<4x4xf32>,
    } else {
    }
    %c0 = arith.constant 0 : index
    %c0_1 = arith.constant 0 : index
    %c0_2 = arith.constant 0 : index
    %3 = vector.load %arg2[%c0, %c0_1, %c0_2] : memref<1x4x256xf32, #tpu.memory_space<vmem>>, vector<1x4x256xf32>
    %4 = vector.shape_cast %3 : vector<1x4x256xf32> to vector<4x256xf32>
    %c0_3 = arith.constant 0 : index
    %c0_4 = arith.constant 0 : index
    %c0_5 = arith.constant 0 : index
    %5 = vector.load %arg3[%c0_3, %c0_4, %c0_5] : memref<1x4x256xf32, #tpu.memory_space<vmem>>, vector<1x4x256xf32>
    %6 = vector.shape_cast %5 : vector<1x4x256xf32> to vector<4x256xf32>
    %cst = arith.constant dense<0.000000e+00> : vector<4x4xf32>
    %7 = tpu.matmul %4, %4, %cst {dimension_numbers = #tpu.dot_dimension_numbers<[1], [1], [0], [0], [0, 0, 1, 0], [], []>} : vector<4x256xf32>, vector<4x256xf32>, vector<4x4xf32> -> vector<4x4xf32>
    %cst_6 = arith.constant dense<0.000000e+00> : vector<4x4xf32>
    %8 = tpu.matmul %6, %6, %cst_6 {dimension_numbers = #tpu.dot_dimension_numbers<[1], [1], [0], [0], [0, 0, 1, 0], [], []>} : vector<4x256xf32>, vector<4x256xf32>, vector<4x4xf32> -> vector<4x4xf32>
    %c0_7 = arith.constant 0 : index
    %c0_8 = arith.constant 0 : index
    %9 = vector.load %arg5[%c0_7, %c0_8] : memref<4x4xf32, #tpu.memory_space<vmem>>, vector<4x4xf32>
    %10 = arith.subf %7, %8 : vector<4x4xf32>
    %11 = arith.addf %9, %10 : vector<4x4xf32>
    %c0_9 = arith.constant 0 : index
    %c0_10 = arith.constant 0 : index
    %12 = vector.load %arg5[%c0_9, %c0_10] : memref<4x4xf32, #tpu.memory_space<vmem>>, vector<4x4xf32>
    tpu.vector_store %arg5[%c0_9, %c0_10], %11 {strides = array<i32>} : memref<4x4xf32, #tpu.memory_space<vmem>>, vector<4x4xf32>,
    %c0_i32_11 = arith.constant 0 : i32
    %13 = arith.cmpi eq, %arg1, %c0_i32_11 : i32
    %14 = arith.extui %13 : i1 to i32
    %c0_i32_12 = arith.constant 0 : i32
    %15 = arith.cmpi ne, %14, %c0_i32_12 : i32
    scf.if %15 {
      %c0_13 = arith.constant 0 : index
      %c0_14 = arith.constant 0 : index
      %16 = vector.load %arg5[%c0_13, %c0_14] : memref<4x4xf32, #tpu.memory_space<vmem>>, vector<4x4xf32>
      %17 = arith.mulf %16, %16 : vector<4x4xf32>
      %18 = vector.shape_cast %17 : vector<4x4xf32> to vector<1x4x4xf32>
      %cst_15 = arith.constant dense<0.000000e+00> : vector<1xf32>
      %19 = vector.multi_reduction <add>, %18, %cst_15 [1, 2] : vector<1x4x4xf32> to vector<1xf32>
      %20 = vector.shape_cast %19 : vector<1xf32> to vector<1x1x1xf32>
      %21 = vector.extract %20[0, 0, 0] : f32 from vector<1x1x1xf32>
      %cst_16 = arith.constant 4.65661287E-10 : f32
      %22 = arith.mulf %21, %cst_16 : f32
      %23 = vector.broadcast %22 : f32 to vector<1x1x128xf32>
      %c0_17 = arith.constant 0 : index
      %c0_18 = arith.constant 0 : index
      %c0_19 = arith.constant 0 : index
      %24 = vector.load %arg4[%c0_17, %c0_18, %c0_19] : memref<1x1x128xf32, #tpu.memory_space<vmem>>, vector<1x1x128xf32>
      tpu.vector_store %arg4[%c0_17, %c0_18, %c0_19], %23 {strides = array<i32>} : memref<1x1x128xf32, #tpu.memory_space<vmem>>, vector<1x1x128xf32>,
    } else {
    }
    return
  }
  func.func @transform_0(%arg0: i32, %arg1: i32) -> (i32, i32, i32) {
    %c0_i32 = arith.constant 0 : i32
    %c0_i32_0 = arith.constant 0 : i32
    return %arg0, %c0_i32, %arg1 : i32, i32, i32
  }
  func.func @transform_1(%arg0: i32, %arg1: i32) -> (i32, i32, i32) {
    %c0_i32 = arith.constant 0 : i32
    %c0_i32_0 = arith.constant 0 : i32
    return %arg0, %c0_i32, %arg1 : i32, i32, i32
  }
  func.func @transform_2(%arg0: i32, %arg1: i32) -> (i32, i32, i32) {
    %c0_i32 = arith.constant 0 : i32
    %c0_i32_0 = arith.constant 0 : i32
    %c0_i32_1 = arith.constant 0 : i32
    return %arg0, %c0_i32, %c0_i32_0 : i32, i32, i32
  }
}

</mosaic_0001>

<llo_original>
// kernel: tpu_custom_call.1
$region0: #{tpu_custom_call.1}
  #allocation0 [shape = 'u32[]', space=smem, size = 0x4, offset = 0x4, fixed_abs, tag = 'smem constant byte address 0x4 - core index']
  #allocation1 [shape = 'u32[72,128]{1,0:T(1,128)}', space=vmem, size = 0x9000, scoped, tag = 'internal scratch']
  #allocation2 [shape = 'f32[4,4]{1,0:T(4,128)}', space=vmem, size = 0x800, scoped, tag = 'scratch operand']
  %s0 = inlined_call_operand.hbm [shape: f32[2,4,256], index: 0, kind: input, shape index: {}]
  %s1 = inlined_call_operand.hbm [shape: f32[2,4,256], index: 1, kind: input, shape index: {}]
  %s2 = inlined_call_operand.hbm [shape: f32[2,1,128], index: 2, kind: output, shape index: {}]
  %s3 = sld [smem:[#allocation0]]
  $region57: #{tpu_custom_call.1} parent=0
    _
  %s5 = ssub.s32 1, %s3
  %s6 = scalar_select 0, %s5, %s3
  $region1: #{tpu_custom_call.1} parent=0
    #allocation3 [shape = 'u8[8192]{0}', space=vmem, size = 0x2000, scoped, tag = 'input window, operand 0']
    #allocation4 [shape = 's32[2]{0}', space=sflag, size = 0x8, scoped, tag = 'scoped memory for tpu_custom_call.1']
    #allocation5 [shape = 's32[2]{0}', space=sflag, size = 0x8, scoped, tag = 'scoped memory for tpu_custom_call.1']
    #allocation6 [shape = 'u8[8192]{0}', space=vmem, size = 0x2000, scoped, tag = 'input window, operand 1']
    #allocation7 [shape = 's32[2]{0}', space=sflag, size = 0x8, scoped, tag = 'scoped memory for tpu_custom_call.1']
    #allocation8 [shape = 'u8[1024]{0}', space=vmem, size = 0x400, scoped, tag = 'output window, operand 0']
    %7 = vsyncpa [#allocation4], 0
    %s8 = scalar_lea.sflag [#allocation4], 1
    %9 = vsyncpa %s8, 0
    %10 = vsyncpa [#allocation7], 0
    %s11 = scalar_lea.sflag [#allocation7], 1
    %12 = vsyncpa %s11, 0
    %13 = vsyncpa [#allocation5], 0
    %s14 = scalar_lea.sflag [#allocation5], 1
    %15 = vsyncpa %s14, 0
    loop: start=0, step=1, limit=4
    $region2: #{tpu_custom_call.1} parent=1 // loop_pre_header
      _
    $region3: #{tpu_custom_call.1} parent=1 // loop_header
      %s17 = sphi 0, %s21
      %p18 = scmp.ge.s32.totalorder %s17, 4
      %s24 = sphi 0, %s36
      %s25 = sphi 0, %s32
      %s26 = sphi 0, %s24
      %s27 = sphi 0, %s25
      %s28 = sphi 0, %s26
      %s29 = sphi 0, %s27
      %s41 = sphi 0, %s43
      %s44 = sphi 0, %s41
      %s45 = sphi 0, %s44
      %s61 = sphi 0, %s45
      %s69 = sphi 0, %s71
      %s72 = sphi 0, %s69
      %s73 = sphi 0, %s72
      %s89 = sphi 0, %s73
      %s95 = sphi 0, %s97
      %s98 = sphi 0, %s95
      %s99 = sphi 0, %s98
      %s115 = sphi 0, %s99
    $region4: #{tpu_custom_call.1} parent=1 // loop_header_branch
      %20 = sbr.rel (%p18) target = $region8
    $region5: #{tpu_custom_call.1} parent=1 // loop_body
      %s22 = ssub.s32 %s17, 1
      %s23 = ssub.s32 %s17, 2
      %s30 = sadd.s32 1, %s25
      %p31 = scmp.ge.s32.totalorder %s30, 1
      %s32 = scalar_select %p31, 0, %s30
      %s33 = sadd.s32 1, %s24
      %s34 = scalar_select %p31, %s33, %s24
      %p35 = scmp.ge.s32.totalorder %s34, 2
      %s36 = scalar_select %p35, 0, %s34
      %s37 = ssub.s32 %s24, %s36
      %s38 = ssub.s32 %s25, %s32
      %s39 = sor.u32 %s37, %s38
      %p40 = scmp.eq.s32.totalorder %s39, 0
      %s42 = sadd.s32 %s41, 1
      %s43 = scalar_select %p40, %s41, %s42
      %p46 = pneg %p40
      %p47 = scmp.eq.s32.totalorder %s17, 1
      %p48 = por %p46, %p47
      %p49 = scmp.ne.s32.totalorder %s41, %s44
      %p50 = scmp.eq.s32.totalorder %s17, 0
      %p51 = por %p49, %p50
      %p52 = scmp.ne.s32.totalorder %s41, %s44
      %p53 = scmp.eq.s32.totalorder %s22, 1
      %p54 = por %p52, %p53
      %p55 = scmp.ne.s32.totalorder %s44, %s45
      %p56 = scmp.eq.s32.totalorder %s22, 0
      %p57 = por %p55, %p56
      %p58 = scmp.ne.s32.totalorder %s44, %s45
      %p59 = scmp.eq.s32.totalorder %s23, 1
      %p60 = por %p58, %p59
      %p62 = scmp.ne.s32.totalorder %s45, %s61
      %p63 = scmp.eq.s32.totalorder %s23, 0
      %p64 = por %p62, %p63
      %s65 = ssub.s32 %s24, %s36
      %s66 = ssub.s32 %s25, %s32
      %s67 = sor.u32 %s65, %s66
      %p68 = scmp.eq.s32.totalorder %s67, 0
      %s70 = sadd.s32 %s69, 1
      %s71 = scalar_select %p68, %s69, %s70
      %p74 = pneg %p68
      %p75 = scmp.eq.s32.totalorder %s17, 1
      %p76 = por %p74, %p75
      %p77 = scmp.ne.s32.totalorder %s69, %s72
      %p78 = scmp.eq.s32.totalorder %s17, 0
      %p79 = por %p77, %p78
      %p80 = scmp.ne.s32.totalorder %s69, %s72
      %p81 = scmp.eq.s32.totalorder %s22, 1
      %p82 = por %p80, %p81
      %p83 = scmp.ne.s32.totalorder %s72, %s73
      %p84 = scmp.eq.s32.totalorder %s22, 0
      %p85 = por %p83, %p84
      %p86 = scmp.ne.s32.totalorder %s72, %s73
      %p87 = scmp.eq.s32.totalorder %s23, 1
      %p88 = por %p86, %p87
      %p90 = scmp.ne.s32.totalorder %s73, %s89
      %p91 = scmp.eq.s32.totalorder %s23, 0
      %p92 = por %p90, %p91
      %s93 = ssub.s32 %s24, %s36
      %p94 = scmp.eq.s32.totalorder %s93, 0
      %s96 = sadd.s32 %s95, 1
      %s97 = scalar_select %p94, %s95, %s96
      %p100 = pneg %p94
      %p101 = scmp.eq.s32.totalorder %s17, 1
      %p102 = por %p100, %p101
      %p103 = scmp.ne.s32.totalorder %s95, %s98
      %p104 = scmp.eq.s32.totalorder %s17, 0
      %p105 = por %p103, %p104
      %p106 = scmp.ne.s32.totalorder %s95, %s98
      %p107 = scmp.eq.s32.totalorder %s22, 1
      %p108 = por %p106, %p107
      %p109 = scmp.ne.s32.totalorder %s98, %s99
      %p110 = scmp.eq.s32.totalorder %s22, 0
      %p111 = por %p109, %p110
      %p112 = scmp.ne.s32.totalorder %s98, %s99
      %p113 = scmp.eq.s32.totalorder %s23, 1
      %p114 = por %p112, %p113
      %p116 = scmp.ne.s32.totalorder %s99, %s115
      %p117 = scmp.eq.s32.totalorder %s23, 0
      %p118 = por %p116, %p117
      %p119 = scmp.le.s32.totalorder 1, %s17
      %p120 = scmp.lt.s32.totalorder %s17, 3
      %p121 = pnand %p119, %p120
      %p122 = pneg %p121
      // Predicated region
      $region9: #{tpu_custom_call.1} parent=5 // pred_check
        _
      $region10: #{tpu_custom_call.1} parent=5 // pred_check_branch
        %124 = sbr.rel (%p121) target = $region12
      $region11: #{tpu_custom_call.1} parent=5 // pred_region
        %s125 = ssub.s32 %s17, 1
      $region12: #{tpu_custom_call.1} parent=5 // pred_fallthru
        _
      %p126 = scmp.lt.s32.totalorder %s17, 2
      // Predicated region
      $region13: #{tpu_custom_call.1} parent=5 // pred_check
        %p127 = pneg %p126
      $region14: #{tpu_custom_call.1} parent=5 // pred_check_branch
        %129 = sbr.rel (%p127) target = $region16
      $region15: #{tpu_custom_call.1} parent=5 // pred_region
        // Predicated region
        $region17: #{tpu_custom_call.1} parent=15 // pred_check
          %p130 = pneg %p51
        $region18: #{tpu_custom_call.1} parent=15 // pred_check_branch
          %132 = sbr.rel (%p130) target = $region20
        $region19: #{tpu_custom_call.1} parent=15 // pred_region
          %s133 = sand.u32 %s41, 1
          %s134 = scalar_lea.sflag [#allocation4], %s133
          %s135 = sand.u32 %s41, 1
          %s136 = smul.addr %s135, 8
          %s137 = scalar_lea.vmem [#allocation3], %s136
          %s138 = smul.u32 2, %s25
          %140 = vsyncadd %s134, 0
          %s141 = smul.addr %s24, 2
          %s142 = sadd.s32 %s138, %s141
          %s143 = smul.addr %s142, 4
          %s144 = scalar_lea.hbm %s0, %s143
          %s146 = sshll.u32 %s144, 4
          %s147 = int_to_ptr.hbm [resolvable:$true] %s146
          %s148 = sshll.u32 %s137, 4
          %s149 = int_to_ptr.vmem [resolvable:$true] %s148
          %151 = dma.hbm_to_vmem [thread:$0]  %s147, 128, %s149, %s134
        $region20: #{tpu_custom_call.1} parent=15 // pred_fallthru
          _
        // Predicated region
        $region21: #{tpu_custom_call.1} parent=15 // pred_check
          %p152 = pneg %p79
        $region22: #{tpu_custom_call.1} parent=15 // pred_check_branch
          %154 = sbr.rel (%p152) target = $region24
        $region23: #{tpu_custom_call.1} parent=15 // pred_region
          %s155 = sand.u32 %s69, 1
          %s156 = scalar_lea.sflag [#allocation7], %s155
          %s157 = sand.u32 %s69, 1
          %s158 = smul.addr %s157, 8
          %s159 = scalar_lea.vmem [#allocation6], %s158
          %s160 = smul.u32 2, %s25
          %162 = vsyncadd %s156, 0
          %s163 = smul.addr %s24, 2
          %s164 = sadd.s32 %s160, %s163
          %s165 = smul.addr %s164, 4
          %s166 = scalar_lea.hbm %s1, %s165
          %s168 = sshll.u32 %s166, 4
          %s169 = int_to_ptr.hbm [resolvable:$true] %s168
          %s170 = sshll.u32 %s159, 4
          %s171 = int_to_ptr.vmem [resolvable:$true] %s170
          %173 = dma.hbm_to_vmem [thread:$0]  %s169, 128, %s171, %s156
        $region24: #{tpu_custom_call.1} parent=15 // pred_fallthru
          _
      $region16: #{tpu_custom_call.1} parent=5 // pred_fallthru
        _
      %p174 = scmp.le.s32.totalorder 1, %s17
      %p175 = scmp.lt.s32.totalorder %s17, 3
      %p176 = pnand %p174, %p175
      %p177 = pneg %p176
      // Predicated region
      $region25: #{tpu_custom_call.1} parent=5 // pred_check
        _
      $region26: #{tpu_custom_call.1} parent=5 // pred_check_branch
        %179 = sbr.rel (%p176) target = $region28
      $region27: #{tpu_custom_call.1} parent=5 // pred_region
        %s180 = ssub.s32 %s17, 1
        %s181 = sand.u32 %s44, 1
        %s182 = scalar_lea.sflag [#allocation4], %s181
        %s183 = sand.u32 %s44, 1
        %s184 = smul.addr %s183, 8
        %s185 = scalar_lea.vmem [#allocation3], %s184
        // Predicated region
        $region29: #{tpu_custom_call.1} parent=27 // pred_check
          %p186 = pneg %p57
        $region30: #{tpu_custom_call.1} parent=27 // pred_check_branch
          %188 = sbr.rel (%p186) target = $region32
        $region31: #{tpu_custom_call.1} parent=27 // pred_region
          %190 = dma.done %s182, 128
        $region32: #{tpu_custom_call.1} parent=27 // pred_fallthru
          _
        %s191 = sand.u32 %s72, 1
        %s192 = scalar_lea.sflag [#allocation7], %s191
        %s193 = sand.u32 %s72, 1
        %s194 = smul.addr %s193, 8
        %s195 = scalar_lea.vmem [#allocation6], %s194
        // Predicated region
        $region33: #{tpu_custom_call.1} parent=27 // pred_check
          %p196 = pneg %p85
        $region34: #{tpu_custom_call.1} parent=27 // pred_check_branch
          %198 = sbr.rel (%p196) target = $region36
        $region35: #{tpu_custom_call.1} parent=27 // pred_region
          %200 = dma.done %s192, 128
        $region36: #{tpu_custom_call.1} parent=27 // pred_fallthru
          _
        %s201 = sand.u32 %s44, 1
        %s202 = scalar_lea.sflag [#allocation4], %s201
        %s203 = sand.u32 %s44, 1
        %s204 = smul.addr %s203, 8
        %s205 = scalar_lea.vmem [#allocation3], %s204
        %p206 = pneg %p57
        %p207 = pneg %p54
        %s208 = sand.u32 %s72, 1
        %s209 = scalar_lea.sflag [#allocation7], %s208
        %s210 = sand.u32 %s72, 1
        %s211 = smul.addr %s210, 8
        %s212 = scalar_lea.vmem [#allocation6], %s211
        %p213 = pneg %p85
        %p214 = pneg %p82
        %p215 = pneg %p111
        %p216 = pneg %p108
        %s217 = sand.u32 %s98, 1
        %s218 = scalar_lea.sflag [#allocation5], %s217
        %s219 = sand.u32 %s98, 1
        %s220 = scalar_lea.vmem [#allocation8], %s219
        %s221 = smul.u32 2, %s27
        %s222 = smul.u32 2, %s27
        %p223 = scmp.eq.s32.totalorder %s27, 0
        // Predicated region
        $region37: #{tpu_custom_call.1} parent=27 // pred_check
          %p224 = pneg %p223
        $region38: #{tpu_custom_call.1} parent=27 // pred_check_branch
          %226 = sbr.rel (%p224) target = $region40
        $region39: #{tpu_custom_call.1} parent=27 // pred_region
          %vm227 = vcmask 27648
          %228 = vst.msk [vmem:[#allocation2] sm:$0xf] %vm227, 0.0
        $region40: #{tpu_custom_call.1} parent=27 // pred_fallthru
          _
        %v229 = vld [vmem:[%s185] sm:$0xff]
        %v230 = vld [vmem:[%s195] sm:$0xff]
        %232 = vst [vmem:[#allocation1] ss:$2 sm:$0xff] %v229
        %v233 = vld.sshfl [vmem:[#allocation1] sm:$0xff pattern:$0x75316420]
        %v234 = vld.sshfl [vmem:[#allocation1 + $0x8] sm:$0xff pattern:$0x75316420]
        %237 = vst [vmem:[#allocation1] ss:$2 sm:$0xff] %v229
        %v238 = vld.sshfl [vmem:[#allocation1] sm:$0xff pattern:$0x75316420]
        %v239 = vld.sshfl [vmem:[#allocation1 + $0x8] sm:$0xff pattern:$0x75316420]
        %242 = vmatpush.xpose.msra.mxu0 0.0
        %243 = vmatpush.xpose.msra.mxu0 0.0
        %244 = vmatpush.xpose.msra.mxu0 0.0
        %245 = vmatpush.xpose.msra.mxu0 0.0
        %246 = vmatpush.xpose.msra.mxu0 0.0
        %247 = vmatpush.xpose.msra.mxu0 0.0
        %248 = vmatpush.xpose.msra.mxu0 0.0
        %249 = vmatpush.xpose.msra.mxu0 0.0
        %250 = vmatpush.xpose.msra.mxu0 0.0
        %251 = vmatpush.xpose.msra.mxu0 0.0
        %252 = vmatpush.xpose.msra.mxu0 0.0
        %253 = vmatpush.xpose.msra.mxu0 0.0
        %254 = vmatpush.xpose.msra.mxu0 0.0
        %255 = vmatpush.xpose.msra.mxu0 0.0
        %256 = vmatpush.xpose.msra.mxu0 0.0
        %257 = vmatpush.xpose.msra.mxu0 %v238
        %258 = vmatmul.f32.gmra.mxu0 %v233
        %v259 = vpop.f32.mrf.mxu0
        %v260 = vadd.f32 0.0, %v259
        %261 = vdwg.mxu0
        %262 = vmatpush.xpose.msra.mxu0 0.0
        %263 = vmatpush.xpose.msra.mxu0 0.0
        %264 = vmatpush.xpose.msra.mxu0 0.0
        %265 = vmatpush.xpose.msra.mxu0 0.0
        %266 = vmatpush.xpose.msra.mxu0 0.0
        %267 = vmatpush.xpose.msra.mxu0 0.0
        %268 = vmatpush.xpose.msra.mxu0 0.0
        %269 = vmatpush.xpose.msra.mxu0 0.0
        %270 = vmatpush.xpose.msra.mxu0 0.0
        %271 = vmatpush.xpose.msra.mxu0 0.0
        %272 = vmatpush.xpose.msra.mxu0 0.0
        %273 = vmatpush.xpose.msra.mxu0 0.0
        %274 = vmatpush.xpose.msra.mxu0 0.0
        %275 = vmatpush.xpose.msra.mxu0 0.0
        %276 = vmatpush.xpose.msra.mxu0 0.0
        %277 = vmatpush.xpose.msra.mxu0 %v239
        %278 = vmatmul.f32.gmra.mxu0 %v234
        %v279 = vpop.f32.mrf.mxu0
        %v280 = vadd.f32 %v260, %v279
        %281 = vdwg.mxu0
        %283 = vst [vmem:[#allocation1] ss:$2 sm:$0xff] %v230
        %v284 = vld.sshfl [vmem:[#allocation1] sm:$0xff pattern:$0x75316420]
        %v285 = vld.sshfl [vmem:[#allocation1 + $0x8] sm:$0xff pattern:$0x75316420]
        %288 = vst [vmem:[#allocation1] ss:$2 sm:$0xff] %v230
        %v289 = vld.sshfl [vmem:[#allocation1] sm:$0xff pattern:$0x75316420]
        %v290 = vld.sshfl [vmem:[#allocation1 + $0x8] sm:$0xff pattern:$0x75316420]
        %293 = vmatpush.xpose.msra.mxu0 0.0
        %294 = vmatpush.xpose.msra.mxu0 0.0
        %295 = vmatpush.xpose.msra.mxu0 0.0
        %296 = vmatpush.xpose.msra.mxu0 0.0
        %297 = vmatpush.xpose.msra.mxu0 0.0
        %298 = vmatpush.xpose.msra.mxu0 0.0
        %299 = vmatpush.xpose.msra.mxu0 0.0
        %300 = vmatpush.xpose.msra.mxu0 0.0
        %301 = vmatpush.xpose.msra.mxu0 0.0
        %302 = vmatpush.xpose.msra.mxu0 0.0
        %303 = vmatpush.xpose.msra.mxu0 0.0
        %304 = vmatpush.xpose.msra.mxu0 0.0
        %305 = vmatpush.xpose.msra.mxu0 0.0
        %306 = vmatpush.xpose.msra.mxu0 0.0
        %307 = vmatpush.xpose.msra.mxu0 0.0
        %308 = vmatpush.xpose.msra.mxu0 %v289
        %309 = vmatmul.f32.gmra.mxu0 %v284
        %v310 = vpop.f32.mrf.mxu0
        %v311 = vadd.f32 0.0, %v310
        %312 = vdwg.mxu0
        %313 = vmatpush.xpose.msra.mxu0 0.0
        %314 = vmatpush.xpose.msra.mxu0 0.0
        %315 = vmatpush.xpose.msra.mxu0 0.0
        %316 = vmatpush.xpose.msra.mxu0 0.0
        %317 = vmatpush.xpose.msra.mxu0 0.0
        %318 = vmatpush.xpose.msra.mxu0 0.0
        %319 = vmatpush.xpose.msra.mxu0 0.0
        %320 = vmatpush.xpose.msra.mxu0 0.0
        %321 = vmatpush.xpose.msra.mxu0 0.0
        %322 = vmatpush.xpose.msra.mxu0 0.0
        %323 = vmatpush.xpose.msra.mxu0 0.0
        %324 = vmatpush.xpose.msra.mxu0 0.0
        %325 = vmatpush.xpose.msra.mxu0 0.0
        %326 = vmatpush.xpose.msra.mxu0 0.0
        %327 = vmatpush.xpose.msra.mxu0 0.0
        %328 = vmatpush.xpose.msra.mxu0 %v290
        %329 = vmatmul.f32.gmra.mxu0 %v285
        %v330 = vpop.f32.mrf.mxu0
        %v331 = vadd.f32 %v311, %v330
        %332 = vdwg.mxu0
        %v333 = vld [vmem:[#allocation2] sm:$0xf]
        %v334 = vsub.f32 %v280, %v331
        %v335 = vadd.f32 %v333, %v334
        %vm336 = vcmask 27648
        %337 = vst.msk [vmem:[#allocation2] sm:$0xf] %vm336, %v335
        // Predicated region
        $region41: #{tpu_custom_call.1} parent=27 // pred_check
          %p338 = pneg %p223
        $region42: #{tpu_custom_call.1} parent=27 // pred_check_branch
          %340 = sbr.rel (%p338) target = $region44
        $region43: #{tpu_custom_call.1} parent=27 // pred_region
          %v341 = vld [vmem:[#allocation2] sm:$0xf]
          %v342 = vmul.f32 %v341, %v341
          %v343 = vsel %vm336, %v342, 0.0
          %344 = vadd.xlane.f32.xlu0 %v343
          %v345 = vpop.xlane.xlu0 %344
          %v346 = vrot.slane %v345, 4
          %v347 = vadd.f32 %v345, %v346
          %v348 = vrot.slane %v347, 2
          %v349 = vadd.f32 %v347, %v348
          %v350 = vrot.slane %v349, 1
          %v351 = vadd.f32 %v349, %v350
          %s352 = vtos %v351
          %s353 = smul.f32 %s352, 4.656613e-10
          %v354 = vstv %s353
          %355 = vst [vmem:[%s220] sm:$0x1] %v354
        $region44: #{tpu_custom_call.1} parent=27 // pred_fallthru
          _
        %s356 = sand.u32 %s98, 1
        %s357 = scalar_lea.sflag [#allocation5], %s356
        %s358 = sand.u32 %s98, 1
        %s359 = scalar_lea.vmem [#allocation8], %s358
        // Predicated region
        $region45: #{tpu_custom_call.1} parent=27 // pred_check
          %p360 = pneg %p108
        $region46: #{tpu_custom_call.1} parent=27 // pred_check_branch
          %362 = sbr.rel (%p360) target = $region48
        $region47: #{tpu_custom_call.1} parent=27 // pred_region
          %364 = vsyncadd %s357, 0
          %s365 = scalar_lea.hbm %s2, %s26
          %s367 = sshll.u32 %s359, 4
          %s368 = int_to_ptr.vmem [resolvable:$true] %s367
          %s369 = sshll.u32 %s365, 4
          %s370 = int_to_ptr.hbm [resolvable:$true] %s369
          %372 = dma.vmem_to_hbm [thread:$0]  %s368, 16, %s370, %s357
        $region48: #{tpu_custom_call.1} parent=27 // pred_fallthru
          _
      $region28: #{tpu_custom_call.1} parent=5 // pred_fallthru
        _
      %p373 = scmp.le.s32.totalorder 2, %s17
      // Predicated region
      $region49: #{tpu_custom_call.1} parent=5 // pred_check
        %p374 = pneg %p373
      $region50: #{tpu_custom_call.1} parent=5 // pred_check_branch
        %376 = sbr.rel (%p374) target = $region52
      $region51: #{tpu_custom_call.1} parent=5 // pred_region
        %s377 = ssub.s32 %s17, 2
        // Predicated region
        $region53: #{tpu_custom_call.1} parent=51 // pred_check
          %p378 = pneg %p114
        $region54: #{tpu_custom_call.1} parent=51 // pred_check_branch
          %380 = sbr.rel (%p378) target = $region56
        $region55: #{tpu_custom_call.1} parent=51 // pred_region
          %s381 = sand.u32 %s99, 1
          %s382 = scalar_lea.sflag [#allocation5], %s381
          %s383 = sand.u32 %s99, 1
          %s384 = scalar_lea.vmem [#allocation8], %s383
          %386 = dma.done %s382, 16
        $region56: #{tpu_custom_call.1} parent=51 // pred_fallthru
          _
      $region52: #{tpu_custom_call.1} parent=5 // pred_fallthru
        _
    $region6: #{tpu_custom_call.1} parent=1 // loop_footer
      %s21 = sadd.s32 1, %s17
    $region7: #{tpu_custom_call.1} parent=1 // loop_footer_branch
      %16 = sbr.rel target = $region3
    $region8: #{tpu_custom_call.1} parent=1 // loop_exit
      _
    %387 = vsyncpa [#allocation4], 1
    %s388 = scalar_lea.sflag [#allocation4], 1
    %389 = vsyncpa %s388, 1
    %390 = vsyncpa [#allocation7], 1
    %s391 = scalar_lea.sflag [#allocation7], 1
    %392 = vsyncpa %s391, 1
    %393 = vsyncpa [#allocation5], 1
    %s394 = scalar_lea.sflag [#allocation5], 1
    %395 = vsyncpa %s394, 1

</llo_original>
